<compile_context>
chip_gen: v5e
topology: v5e:2x2
jax: 0.10.0
libtpu: 0.0.40
codegen_flags: <defaults>
</compile_context>

<pallas_src>
import functools
import math

import jax
import jax.numpy as jnp
from jax.experimental import pallas as pl
from jax.experimental.pallas import tpu as pltpu


def _patch_embed_kernel(patches_ref, w_ref, pos_ref, out_ref):
    """One grid step = TM packed patch rows of one batch element.

    patches_ref: (1, TM, Kp)   bf16 packed flattened patches
    w_ref:       (Kp, Dp)      bf16 (block-diagonal) projection weight, resident
    pos_ref:     (Np_pad, Dp)  f32  packed (pos_emb[1:] + bias), resident
    out_ref:     (1, TM, Dp)   packed patch embeddings
    """
    tm = out_ref.shape[1]
    start = pl.program_id(1) * tm
    if tm % 8 == 0:
        start = pl.multiple_of(start, 8)
    proj = jnp.dot(patches_ref[0], w_ref[...],
                   preferred_element_type=jnp.float32)        # (TM, Dp) f32 acc
    pos = pos_ref[pl.ds(start, tm), :]                        # (TM, Dp) f32
    out_ref[0] = (proj + pos).astype(out_ref.dtype)


def _lane_pack_factor(n_patches, emb_dim):
    """Smallest G with (G*emb_dim) % 128 == 0, if it divides n_patches."""
    if emb_dim % 128 == 0:
        return 1
    g = 128 // math.gcd(emb_dim, 128)
    if n_patches % g == 0:
        return g
    # TODO(synk): pad N to a multiple of g to keep lane-dense stores for odd N.
    return 1


def _choose_tile_rows(np_rows, batch, *, target=256, min_steps=8, tiny_rows=1024):
    """Packed rows per grid step (within one batch element)."""
    if batch * np_rows <= tiny_rows:
        # Tiny problem: everything fits in a step or two; per-step overhead and
        # pipeline prologue dominate, so do NOT split for "pipelining".
        return np_rows
    tm = min(np_rows, target)
    if tm < np_rows:
        tm = max(8, (tm // 8) * 8)
    # Keep enough grid steps for v7x's two TensorCores + pipeline depth.
    while tm >= 128 and batch * (-(-np_rows // tm)) < min_steps:
        tm //= 2
    return tm


def patch_embedding(x, w, b, cls_token, pos_emb, *, patch_size,
                    out_dtype=None, tile_rows=None):
    """x: (B, C, H, W). w: (K, D) pre-transposed nn.Linear weight. b: (1, D).
    cls_token: (1, D). pos_emb: (N+1, D). Returns (B, N+1, D) in out_dtype
    (defaults to x.dtype, matching the PyTorch module)."""
    B, C, H, W = x.shape
    p = patch_size
    nh, nw = H // p, W // p
    N = nh * nw
    K = C * p * p
    D = w.shape[1]
    out_dtype = x.dtype if out_dtype is None else out_dtype

    # ---- wrapper-side prep (layout-only / tiny XLA ops) ---------------------
    # Patchify exactly like torch unfold/permute/view; bf16 halves these bytes.
    xb = x.astype(jnp.bfloat16)
    patches = xb.reshape(B, C, nh, p, nw, p)
    patches = jnp.transpose(patches, (0, 2, 4, 1, 3, 5)).reshape(B, N, K)

    # Lane-dense packing: group G consecutive patch rows so the last dim is a
    # multiple of 128. Pure row-major reshapes -> free views.
    G = _lane_pack_factor(N, D)
    Np, Kp, Dp = N // G, G * K, G * D
    patches = patches.reshape(B, Np, Kp)

    wb = w.astype(jnp.bfloat16)
    if G > 1:
        # Block-diagonal weight: packed-row @ Wbd == G independent rows @ W.
        wb = jnp.einsum("gh,kd->gkhd", jnp.eye(G, dtype=wb.dtype), wb)
        wb = wb.reshape(Kp, Dp)

    # Fold bias + positional embedding for the patch rows; packed, f32, resident.
    pos_patches = (pos_emb[1:] + b).astype(jnp.float32).reshape(Np, Dp)

    tm = tile_rows if tile_rows is not None else _choose_tile_rows(Np, B)
    assert tm == Np or tm % 8 == 0, "tile_rows must be a multiple of 8 or == N//G"
    n_j = -(-Np // tm)
    np_pad = n_j * tm
    if np_pad != Np:
        # Pad so the in-kernel pl.ds slice of the resident table stays in bounds.
        pos_patches = jnp.pad(pos_patches, ((0, np_pad - Np), (0, 0)))

    # Scoped-VMEM estimate: double-buffered streamed tiles + resident blocks.
    est = (2 * tm * Kp * 2                                   # patches (bf16)
           + 2 * tm * Dp * jnp.dtype(out_dtype).itemsize     # output tiles
           + Kp * Dp * 2                                     # weight (bf16)
           + np_pad * Dp * 4                                 # pos table (f32)
           + tm * Dp * 4)                                    # f32 accumulator
    vmem_limit = min(4 * est, 48 * 1024 * 1024) if est > 8 * 1024 * 1024 else None

    proj = pl.pallas_call(
        _patch_embed_kernel,
        out_shape=jax.ShapeDtypeStruct((B, Np, Dp), out_dtype),
        grid_spec=pltpu.PrefetchScalarGridSpec(
            num_scalar_prefetch=0,
            grid=(B, n_j),
            in_specs=[
                pl.BlockSpec((1, tm, Kp), lambda bi, j: (bi, j, 0)),
                pl.BlockSpec((Kp, Dp), lambda bi, j: (0, 0)),        # resident
                pl.BlockSpec((np_pad, Dp), lambda bi, j: (0, 0)),    # resident
            ],
            out_specs=pl.BlockSpec((1, tm, Dp), lambda bi, j: (bi, j, 0)),
        ),
        compiler_params=pltpu.CompilerParams(
            dimension_semantics=("parallel", "parallel"),
            vmem_limit_bytes=vmem_limit),
    )(patches, wb, pos_patches)

    proj = proj.reshape(B, N, D)                              # free row-major view
    cls_row = (cls_token + pos_emb[0:1]).astype(out_dtype)    # (1, D)
    cls_rows = jnp.broadcast_to(cls_row[None], (B, 1, D))
    return jnp.concatenate([cls_rows, proj], axis=1)          # (B, N+1, D)


def _reference(x, w, b, cls_token, pos_emb, *, patch_size, bf16_inputs, out_dtype):
    """Pure-JAX reference mirroring the PyTorch forward (optionally with the
    same bf16 input rounding / f32 accumulation as the kernel)."""
    B, C, H, W = x.shape
    p = patch_size
    nh, nw = H // p, W // p
    D = w.shape[1]
    cast = (lambda a: a.astype(jnp.bfloat16)) if bf16_inputs else (lambda a: a)
    patches = cast(x).reshape(B, C, nh, p, nw, p)
    patches = jnp.transpose(patches, (0, 2, 4, 1, 3, 5)).reshape(B, nh * nw, -1)
    proj = jnp.einsum("bnk,kd->bnd", patches, cast(w),
                      preferred_element_type=jnp.float32)
    proj = proj + (pos_emb[1:] + b)[None]
    cls = jnp.broadcast_to((cls_token + pos_emb[0:1])[None], (B, 1, D))
    out = jnp.concatenate([cls.astype(jnp.float32), proj], axis=1)
    return out.astype(out_dtype)


if __name__ == "__main__":
    # Small config consistent with the module: img_size=16, patch_size=2,
    # in_channels=3, emb_dim=32 -> N=64, K=12. emb_dim % 128 != 0 exercises the
    # lane-dense packing path (G=4: Np=16, Kp=48, Dp=128).
    img_size = 16
    patch_size = 2
    in_channels = 3
    emb_dim = 32
    batch = 2
    n_patches = (img_size // patch_size) ** 2
    K = in_channels * patch_size * patch_size

    key = jax.random.PRNGKey(0)
    kx, kw, kb, kc, kp = jax.random.split(key, 5)

    x = jax.random.normal(kx, (batch, in_channels, img_size, img_size),
                          dtype=jnp.float32)
    # Synthetic params: nn.Linear(K, D) weight (pre-transposed) + bias,
    # cls_token (1,1,D) squeezed to (1,D), nn.Embedding(N+1, D) table.
    w = jax.random.normal(kw, (K, emb_dim), dtype=jnp.float32) * 0.02
    b = jax.random.normal(kb, (1, emb_dim), dtype=jnp.float32) * 0.02
    cls_token = jax.random.normal(kc, (1, emb_dim), dtype=jnp.float32)
    pos_emb = jax.random.normal(kp, (n_patches + 1, emb_dim),
                                dtype=jnp.float32) * 0.02

    # Default path: output dtype matches the PyTorch module (f32).
    fn = jax.jit(functools.partial(patch_embedding, patch_size=patch_size))
    out = jax.block_until_ready(fn(x, w, b, cls_token, pos_emb))
    assert out.shape == (batch, n_patches + 1, emb_dim), out.shape
    assert out.dtype == x.dtype

    # Tight check vs. a reference with identical bf16 input rounding.
    ref_bf16 = _reference(x, w, b, cls_token, pos_emb, patch_size=patch_size,
                          bf16_inputs=True, out_dtype=x.dtype)
    assert jnp.allclose(out, ref_bf16, atol=1e-4, rtol=1e-4), \
        "mismatch vs bf16-mirrored reference"

    # Loose sanity check vs. the full-f32 PyTorch-equivalent reference.
    ref_f32 = _reference(x, w, b, cls_token, pos_emb, patch_size=patch_size,
                         bf16_inputs=False, out_dtype=x.dtype)
    assert jnp.allclose(out, ref_f32, atol=1e-2, rtol=1e-2), \
        "mismatch vs f32 reference"

    # bf16 writeback variant (halves the dominant output HBM stream).
    fn16 = jax.jit(functools.partial(patch_embedding, patch_size=patch_size,
                                     out_dtype=jnp.bfloat16))
    out16 = jax.block_until_ready(fn16(x, w, b, cls_token, pos_emb))
    assert out16.dtype == jnp.bfloat16
    assert jnp.allclose(out16.astype(jnp.float32), ref_bf16,
                        atol=1e-2, rtol=1e-2), "mismatch vs reference (bf16 out)"

    print("KERNEL_OK")
</pallas_src>

<mosaic_0001>
module attributes {stable_mosaic.version = 11 : i64} {
  func.func @_patch_embed_kernel(%arg0: i32, %arg1: i32, %arg2: memref<1x16x48xbf16, #tpu.memory_space<vmem>>, %arg3: memref<48x128xbf16, #tpu.memory_space<vmem>>, %arg4: memref<16x128xf32, #tpu.memory_space<vmem>>, %arg5: memref<1x16x128xf32, #tpu.memory_space<vmem>>) attributes {dimension_semantics = [#tpu.dimension_semantics<parallel>, #tpu.dimension_semantics<parallel>], iteration_bounds = array<i64: 2, 1>, scalar_prefetch = 0 : i64, scratch_operands = 0 : i64, tpu.core_type = #tpu.core_type<tc>, window_params = [{transform_indices = @transform_0, window_bounds = array<i64: 1, 16, 48>}, {pipeline_mode = #tpu.pipeline_mode<synchronous>, transform_indices = @transform_1, window_bounds = array<i64: 48, 128>}, {pipeline_mode = #tpu.pipeline_mode<synchronous>, transform_indices = @transform_2, window_bounds = array<i64: 16, 128>}, {transform_indices = @transform_3, window_bounds = array<i64: 1, 16, 128>}]} {
    %c16_i32 = arith.constant 16 : i32
    %0 = arith.muli %arg1, %c16_i32 : i32
    %1 = tpu.assume_multiple %0, 8 : i32
    %c0 = arith.constant 0 : index
    %c0_0 = arith.constant 0 : index
    %c0_1 = arith.constant 0 : index
    %2 = vector.load %arg2[%c0, %c0_0, %c0_1] : memref<1x16x48xbf16, #tpu.memory_space<vmem>>, vector<1x16x48xbf16>
    %3 = vector.shape_cast %2 : vector<1x16x48xbf16> to vector<16x48xbf16>
    %c0_2 = arith.constant 0 : index
    %c0_3 = arith.constant 0 : index
    %4 = vector.load %arg3[%c0_2, %c0_3] : memref<48x128xbf16, #tpu.memory_space<vmem>>, vector<48x128xbf16>
    %cst = arith.constant dense<0.000000e+00> : vector<16x128xf32>
    %5 = tpu.matmul %3, %4, %cst {dimension_numbers = #tpu.dot_dimension_numbers<[1], [0], [0], [1], [0, 0, 1, 1], [], []>} : vector<16x48xbf16>, vector<48x128xbf16>, vector<16x128xf32> -> vector<16x128xf32>
    %6 = arith.index_cast %1 : i32 to index
    %c0_4 = arith.constant 0 : index
    %7 = vector.load %arg4[%6, %c0_4] : memref<16x128xf32, #tpu.memory_space<vmem>>, vector<16x128xf32>
    %8 = arith.addf %5, %7 : vector<16x128xf32>
    %c0_5 = arith.constant 0 : index
    %c0_6 = arith.constant 0 : index
    %c0_7 = arith.constant 0 : index
    %9 = vector.load %arg5[%c0_5, %c0_6, %c0_7] : memref<1x16x128xf32, #tpu.memory_space<vmem>>, vector<1x16x128xf32>
    %10 = vector.shape_cast %9 : vector<1x16x128xf32> to vector<16x128xf32>
    %11 = vector.shape_cast %8 : vector<16x128xf32> to vector<1x16x128xf32>
    tpu.vector_store %arg5[%c0_5, %c0_6, %c0_7], %11 {strides = array<i32>} : memref<1x16x128xf32, #tpu.memory_space<vmem>>, vector<1x16x128xf32>,
    return
  }
  func.func @transform_0(%arg0: i32, %arg1: i32) -> (i32, i32, i32) {
    %c0_i32 = arith.constant 0 : i32
    %c0_i32_0 = arith.constant 0 : i32
    return %arg0, %arg1, %c0_i32 : i32, i32, i32
  }
  func.func @transform_1(%arg0: i32, %arg1: i32) -> (i32, i32) {
    %c0_i32 = arith.constant 0 : i32
    %c0_i32_0 = arith.constant 0 : i32
    %c0_i32_1 = arith.constant 0 : i32
    return %c0_i32, %c0_i32_0 : i32, i32
  }
  func.func @transform_2(%arg0: i32, %arg1: i32) -> (i32, i32) {
    %c0_i32 = arith.constant 0 : i32
    %c0_i32_0 = arith.constant 0 : i32
    %c0_i32_1 = arith.constant 0 : i32
    return %c0_i32, %c0_i32_0 : i32, i32
  }
  func.func @transform_3(%arg0: i32, %arg1: i32) -> (i32, i32, i32) {
    %c0_i32 = arith.constant 0 : i32
    %c0_i32_0 = arith.constant 0 : i32
    return %arg0, %arg1, %c0_i32 : i32, i32, i32
  }
}

</mosaic_0001>

<llo_original>
// kernel: patch_embedding.1
$region0: #{patch_embedding.1}
  #allocation0 [shape = 'u32[]', space=smem, size = 0x4, offset = 0x4, fixed_abs, tag = 'smem constant byte address 0x4 - core index']
  #allocation1 [shape = 'u32[72,128]{1,0:T(1,128)}', space=vmem, size = 0x9000, scoped, tag = 'internal scratch']
  %s0 = inlined_call_operand.vmem [shape: bf16[2,16,48], index: 0, kind: input, shape index: {}]
  %s1 = inlined_call_operand.vmem [shape: bf16[48,128], index: 1, kind: input, shape index: {}]
  %s2 = inlined_call_operand.vmem [shape: f32[16,128], index: 2, kind: input, shape index: {}]
  %s3 = inlined_call_operand.vmem [shape: f32[2,16,128], index: 3, kind: output, shape index: {}]
  %s4 = sld [smem:[#allocation0]]
  $region45: #{patch_embedding.1} parent=0
    _
  %s6 = ssub.s32 1, %s4
  %s7 = scalar_select 0, %s6, %s4
  loop: start=0, step=1, limit=4
  $region2: #{patch_embedding.1} parent=0 // loop_pre_header
    _
  $region3: #{patch_embedding.1} parent=0 // loop_header
    %s9 = sphi 0, %s13
    %p10 = scmp.ge.s32.totalorder %s9, 4
    %s16 = sphi 0, %s28
    %s17 = sphi 0, %s24
    %s18 = sphi 0, %s16
    %s19 = sphi 0, %s17
    %s20 = sphi 0, %s18
    %s21 = sphi 0, %s19
    %s33 = sphi 0, %s35
    %s36 = sphi 0, %s33
    %s37 = sphi 0, %s36
    %s53 = sphi 0, %s37
    %s57 = sphi 0, %s57
    %s59 = sphi 0, %s57
    %s60 = sphi 0, %s59
    %s74 = sphi 0, %s60
    %s78 = sphi 0, %s78
    %s80 = sphi 0, %s78
    %s81 = sphi 0, %s80
    %s95 = sphi 0, %s81
    %s103 = sphi 0, %s105
    %s106 = sphi 0, %s103
    %s107 = sphi 0, %s106
    %s123 = sphi 0, %s107
  $region4: #{patch_embedding.1} parent=0 // loop_header_branch
    %12 = sbr.rel (%p10) target = $region8
  $region5: #{patch_embedding.1} parent=0 // loop_body
    %s14 = ssub.s32 %s9, 1
    %s15 = ssub.s32 %s9, 2
    %s22 = sadd.s32 1, %s17
    %p23 = scmp.ge.s32.totalorder %s22, 1
    %s24 = scalar_select %p23, 0, %s22
    %s25 = sadd.s32 1, %s16
    %s26 = scalar_select %p23, %s25, %s16
    %p27 = scmp.ge.s32.totalorder %s26, 2
    %s28 = scalar_select %p27, 0, %s26
    %s29 = ssub.s32 %s16, %s28
    %s30 = ssub.s32 %s17, %s24
    %s31 = sor.u32 %s29, %s30
    %p32 = scmp.eq.s32.totalorder %s31, 0
    %s34 = sadd.s32 %s33, 1
    %s35 = scalar_select %p32, %s33, %s34
    %p38 = pneg %p32
    %p39 = scmp.eq.s32.totalorder %s9, 1
    %p40 = por %p38, %p39
    %p41 = scmp.ne.s32.totalorder %s33, %s36
    %p42 = scmp.eq.s32.totalorder %s9, 0
    %p43 = por %p41, %p42
    %p44 = scmp.ne.s32.totalorder %s33, %s36
    %p45 = scmp.eq.s32.totalorder %s14, 1
    %p46 = por %p44, %p45
    %p47 = scmp.ne.s32.totalorder %s36, %s37
    %p48 = scmp.eq.s32.totalorder %s14, 0
    %p49 = por %p47, %p48
    %p50 = scmp.ne.s32.totalorder %s36, %s37
    %p51 = scmp.eq.s32.totalorder %s15, 1
    %p52 = por %p50, %p51
    %p54 = scmp.ne.s32.totalorder %s37, %s53
    %p55 = scmp.eq.s32.totalorder %s15, 0
    %p56 = por %p54, %p55
    %s58 = sadd.s32 %s57, 1
    %p61 = scmp.eq.s32.totalorder %s9, 1
    %p62 = scmp.ne.s32.totalorder %s57, %s59
    %p63 = scmp.eq.s32.totalorder %s9, 0
    %p64 = por %p62, %p63
    %p65 = scmp.ne.s32.totalorder %s57, %s59
    %p66 = scmp.eq.s32.totalorder %s14, 1
    %p67 = por %p65, %p66
    %p68 = scmp.ne.s32.totalorder %s59, %s60
    %p69 = scmp.eq.s32.totalorder %s14, 0
    %p70 = por %p68, %p69
    %p71 = scmp.ne.s32.totalorder %s59, %s60
    %p72 = scmp.eq.s32.totalorder %s15, 1
    %p73 = por %p71, %p72
    %p75 = scmp.ne.s32.totalorder %s60, %s74
    %p76 = scmp.eq.s32.totalorder %s15, 0
    %p77 = por %p75, %p76
    %s79 = sadd.s32 %s78, 1
    %p82 = scmp.eq.s32.totalorder %s9, 1
    %p83 = scmp.ne.s32.totalorder %s78, %s80
    %p84 = scmp.eq.s32.totalorder %s9, 0
    %p85 = por %p83, %p84
    %p86 = scmp.ne.s32.totalorder %s78, %s80
    %p87 = scmp.eq.s32.totalorder %s14, 1
    %p88 = por %p86, %p87
    %p89 = scmp.ne.s32.totalorder %s80, %s81
    %p90 = scmp.eq.s32.totalorder %s14, 0
    %p91 = por %p89, %p90
    %p92 = scmp.ne.s32.totalorder %s80, %s81
    %p93 = scmp.eq.s32.totalorder %s15, 1
    %p94 = por %p92, %p93
    %p96 = scmp.ne.s32.totalorder %s81, %s95
    %p97 = scmp.eq.s32.totalorder %s15, 0
    %p98 = por %p96, %p97
    %s99 = ssub.s32 %s16, %s28
    %s100 = ssub.s32 %s17, %s24
    %s101 = sor.u32 %s99, %s100
    %p102 = scmp.eq.s32.totalorder %s101, 0
    %s104 = sadd.s32 %s103, 1
    %s105 = scalar_select %p102, %s103, %s104
    %p108 = pneg %p102
    %p109 = scmp.eq.s32.totalorder %s9, 1
    %p110 = por %p108, %p109
    %p111 = scmp.ne.s32.totalorder %s103, %s106
    %p112 = scmp.eq.s32.totalorder %s9, 0
    %p113 = por %p111, %p112
    %p114 = scmp.ne.s32.totalorder %s103, %s106
    %p115 = scmp.eq.s32.totalorder %s14, 1
    %p116 = por %p114, %p115
    %p117 = scmp.ne.s32.totalorder %s106, %s107
    %p118 = scmp.eq.s32.totalorder %s14, 0
    %p119 = por %p117, %p118
    %p120 = scmp.ne.s32.totalorder %s106, %s107
    %p121 = scmp.eq.s32.totalorder %s15, 1
    %p122 = por %p120, %p121
    %p124 = scmp.ne.s32.totalorder %s107, %s123
    %p125 = scmp.eq.s32.totalorder %s15, 0
    %p126 = por %p124, %p125
    %p127 = scmp.le.s32.totalorder 1, %s9
    %p128 = scmp.lt.s32.totalorder %s9, 3
    %p129 = pnand %p127, %p128
    %p130 = pneg %p129
    // Predicated region
    $region9: #{patch_embedding.1} parent=5 // pred_check
      _
    $region10: #{patch_embedding.1} parent=5 // pred_check_branch
      %132 = sbr.rel (%p129) target = $region12
    $region11: #{patch_embedding.1} parent=5 // pred_region
      %s133 = ssub.s32 %s9, 1
      // Predicated region
      $region13: #{patch_embedding.1} parent=11 // pred_check
        %p134 = pneg %p70
      $region14: #{patch_embedding.1} parent=11 // pred_check_branch
        %136 = sbr.rel (%p134) target = $region16
      $region15: #{patch_embedding.1} parent=11 // pred_region
        _
      $region16: #{patch_embedding.1} parent=11 // pred_fallthru
        _
      // Predicated region
      $region17: #{patch_embedding.1} parent=11 // pred_check
        %p137 = pneg %p91
      $region18: #{patch_embedding.1} parent=11 // pred_check_branch
        %139 = sbr.rel (%p137) target = $region20
      $region19: #{patch_embedding.1} parent=11 // pred_region
        _
      $region20: #{patch_embedding.1} parent=11 // pred_fallthru
        _
    $region12: #{patch_embedding.1} parent=5 // pred_fallthru
      _
    %p140 = scmp.lt.s32.totalorder %s9, 2
    // Predicated region
    $region21: #{patch_embedding.1} parent=5 // pred_check
      %p141 = pneg %p140
    $region22: #{patch_embedding.1} parent=5 // pred_check_branch
      %143 = sbr.rel (%p141) target = $region24
    $region23: #{patch_embedding.1} parent=5 // pred_region
      // Predicated region
      $region25: #{patch_embedding.1} parent=23 // pred_check
        %p144 = pneg %p43
      $region26: #{patch_embedding.1} parent=23 // pred_check_branch
        %146 = sbr.rel (%p144) target = $region28
      $region27: #{patch_embedding.1} parent=23 // pred_region
        %s147 = smul.u32 2, %s17
        %p148 = scmp.lt.s32.totalorder %s16, 1
        %s149 = scalar_select %p148, %s16, 1
        %p150 = scmp.lt.s32.totalorder %s147, 1
        %s151 = scalar_select %p150, %s147, 1
        %s152 = smul.addr %s149, 2
        %s153 = sadd.s32 %s151, %s152
        %s154 = smul.addr %s153, 4
        %s155 = scalar_lea.vmem %s0, %s154
        %s156 = smul.u32 2, %s17
      $region28: #{patch_embedding.1} parent=23 // pred_fallthru
        _
    $region24: #{patch_embedding.1} parent=5 // pred_fallthru
      _
    %p157 = scmp.le.s32.totalorder 1, %s9
    %p158 = scmp.lt.s32.totalorder %s9, 3
    %p159 = pnand %p157, %p158
    %p160 = pneg %p159
    // Predicated region
    $region29: #{patch_embedding.1} parent=5 // pred_check
      _
    $region30: #{patch_embedding.1} parent=5 // pred_check_branch
      %162 = sbr.rel (%p159) target = $region32
    $region31: #{patch_embedding.1} parent=5 // pred_region
      %s163 = ssub.s32 %s9, 1
      %s164 = smul.u32 2, %s19
      %p165 = scmp.lt.s32.totalorder %s18, 1
      %s166 = scalar_select %p165, %s18, 1
      %p167 = scmp.lt.s32.totalorder %s164, 1
      %s168 = scalar_select %p167, %s164, 1
      %s169 = smul.addr %s166, 2
      %s170 = sadd.s32 %s168, %s169
      %s171 = smul.addr %s170, 4
      %s172 = scalar_lea.vmem %s0, %s171
      %p173 = pneg %p49
      %p174 = pneg %p46
      %p175 = pneg %p70
      %p176 = pneg %p67
      %p177 = pneg %p91
      %p178 = pneg %p88
      %p179 = pneg %p119
      %p180 = pneg %p116
      %s181 = smul.u32 2, %s19
      %p182 = scmp.lt.s32.totalorder %s18, 1
      %s183 = scalar_select %p182, %s18, 1
      %p184 = scmp.lt.s32.totalorder %s181, 1
      %s185 = scalar_select %p184, %s181, 1
      %s186 = smul.addr %s183, 2
      %s187 = sadd.s32 %s185, %s186
      %s188 = smul.addr %s187, 8
      %s189 = scalar_lea.vmem %s3, %s188
      %s190 = smul.u32 2, %s19
      %p191 = scmp.lt.s32.totalorder %s18, 1
      %s192 = scalar_select %p191, %s18, 1
      %p193 = scmp.lt.s32.totalorder %s190, 1
      %s194 = scalar_select %p193, %s190, 1
      %s195 = smul.addr %s192, 2
      %s196 = sadd.s32 %s194, %s195
      %s197 = smul.addr %s196, 4
      %s198 = scalar_lea.vmem %s0, %s197
      %s199 = smul.u32 2, %s19
      %s200 = smul.u32 2, %s19
      %p201 = scmp.lt.s32.totalorder %s18, 1
      %s202 = scalar_select %p201, %s18, 1
      %p203 = scmp.lt.s32.totalorder %s200, 1
      %s204 = scalar_select %p203, %s200, 1
      %s205 = smul.addr %s202, 2
      %s206 = sadd.s32 %s204, %s205
      %s207 = smul.addr %s206, 8
      %s208 = scalar_lea.vmem %s3, %s207
      %s209 = smul.u32 2, %s19
      %s211 = smul.u32 %s19, 16
      %v212 = vld [vmem:[%s198] sm:$0xf]
      %v213 = vld [vmem:[%s198 + $0x4] sm:$0xf]
      %v214 = vld [vmem:[%s1] sm:$0xf]
      %v215 = vld [vmem:[%s1 + $0x4] sm:$0xf]
      %v216 = vld [vmem:[%s1 + $0x8] sm:$0xf]
      %v217 = vld [vmem:[%s1 + $0xc] sm:$0xf]
      %v218 = vld [vmem:[%s1 + $0x10] sm:$0xf]
      %v219 = vld [vmem:[%s1 + $0x14] sm:$0xf]
      %s220 = scalar_lea.vmem %s2, %s211
      %v221 = vld [vmem:[%s220] sm:$0xff]
      %v222 = vld [vmem:[%s220 + $0x8] sm:$0xff]
      %v225 = vunpack.c.l.b16 %v212
      %v226 = vunpack.c.l.b16 %v213
      %v227 = vpack.c.b16 %v226, %v225
      %v234 = vunpack.c.l.b16 %v214
      %v235 = vunpack.c.l.b16 %v215
      %v236 = vunpack.c.l.b16 %v216
      %v237 = vunpack.c.l.b16 %v217
      %v238 = vunpack.c.l.b16 %v218
      %v239 = vunpack.c.l.b16 %v219
      %v240 = vpack.c.b16 %v235, %v234
      %v241 = vpack.c.b16 %v237, %v236
      %v242 = vpack.c.b16 %v239, %v238
      %vm246 = vcmask 392192
      %v248 = vsel %vm246, %v227, 0
      %250 = vmatpush.bf16.msra.mxu0 0
      %251 = vmatpush.bf16.msra.mxu0 0
      %252 = vmatpush.bf16.msra.mxu0 0
      %253 = vmatpush.bf16.msra.mxu0 0
      %254 = vmatpush.bf16.msra.mxu0 0
      %255 = vmatpush.bf16.msra.mxu0 %v242
      %256 = vmatpush.bf16.msra.mxu0 %v241
      %257 = vmatpush.bf16.msra.mxu0 %v240
      %258 = vmatmul.bf16.gmra.mxu0 %v248
      %v259 = vpop.f32.mrf.mxu0
      %v260 = vadd.f32 %v221, %v259
      %v261 = vpop.f32.mrf.mxu0
      %v262 = vadd.f32 %v222, %v261
      %263 = vdwg.mxu0
      %264 = vst [vmem:[%s208] sm:$0xff] %v260
      %265 = vst [vmem:[%s208 + $0x8] sm:$0xff] %v262
      %s266 = smul.u32 2, %s19
      %p267 = scmp.lt.s32.totalorder %s18, 1
      %s268 = scalar_select %p267, %s18, 1
      %p269 = scmp.lt.s32.totalorder %s266, 1
      %s270 = scalar_select %p269, %s266, 1
      %s271 = smul.addr %s268, 2
      %s272 = sadd.s32 %s270, %s271
      %s273 = smul.addr %s272, 8
      %s274 = scalar_lea.vmem %s3, %s273
      // Predicated region
      $region33: #{patch_embedding.1} parent=31 // pred_check
        %p275 = pneg %p116
      $region34: #{patch_embedding.1} parent=31 // pred_check_branch
        %277 = sbr.rel (%p275) target = $region36
      $region35: #{patch_embedding.1} parent=31 // pred_region
        %s278 = smul.u32 2, %s19
      $region36: #{patch_embedding.1} parent=31 // pred_fallthru
        _
    $region32: #{patch_embedding.1} parent=5 // pred_fallthru
      _
    %p279 = scmp.le.s32.totalorder 2, %s9
    // Predicated region
    $region37: #{patch_embedding.1} parent=5 // pred_check
      %p280 = pneg %p279
    $region38: #{patch_embedding.1} parent=5 // pred_check_branch
      %282 = sbr.rel (%p280) target = $region40
    $region39: #{patch_embedding.1} parent=5 // pred_region
      %s283 = ssub.s32 %s9, 2
      // Predicated region
      $region41: #{patch_embedding.1} parent=39 // pred_check
        %p284 = pneg %p122
      $region42: #{patch_embedding.1} parent=39 // pred_check_branch
        %286 = sbr.rel (%p284) target = $region44
      $region43: #{patch_embedding.1} parent=39 // pred_region
        %s287 = smul.u32 2, %s21
        %p288 = scmp.lt.s32.totalorder %s20, 1
        %s289 = scalar_select %p288, %s20, 1
        %p290 = scmp.lt.s32.totalorder %s287, 1
        %s291 = scalar_select %p290, %s287, 1
        %s292 = smul.addr %s289, 2
        %s293 = sadd.s32 %s291, %s292
        %s294 = smul.addr %s293, 8
        %s295 = scalar_lea.vmem %s3, %s294
      $region44: #{patch_embedding.1} parent=39 // pred_fallthru
        _
    $region40: #{patch_embedding.1} parent=5 // pred_fallthru
      _
  $region6: #{patch_embedding.1} parent=0 // loop_footer
    %s13 = sadd.s32 1, %s9
  $region7: #{patch_embedding.1} parent=0 // loop_footer_branch
    %8 = sbr.rel target = $region3
  $region8: #{patch_embedding.1} parent=0 // loop_exit
    _

</llo_original>
